<compile_context>
chip_gen: v7x
topology: tpu7x:2x2x1
jax: 0.10.0
libtpu: 0.0.40
codegen_flags: <defaults>
</compile_context>

<pallas_src>
import jax
import jax.numpy as jnp
from jax import lax
from jax.experimental import pallas as pl
from jax.experimental.pallas import tpu as pltpu

_LANES = 128
_INNER_ROWS = 128          # rows per fori_loop iteration (16 vregs per input @ f32)
_TILE_BYTES = 4 << 20      # per-input, per-pipeline-buffer streaming tile budget


def _round_up(x, m):
    return ((x + m - 1) // m) * m


def _num_tensorcores_per_chip():
    """Best-effort TensorCore count per chip (2 on v7x, else 1). Safe fallback = 1."""
    try:
        info = pltpu.get_tpu_info()
        for name in ("num_cores", "core_count", "num_tensorcores",
                     "tensorcores_per_chip", "cores_per_chip"):
            v = getattr(info, name, None)
            if isinstance(v, int) and 1 <= v <= 16:
                return min(int(v), 2)
    except Exception:
        pass
    try:
        kind = jax.devices()[0].device_kind.lower()
        if "v7" in kind or "7x" in kind:
            return 2
    except Exception:
        pass
    return 1


def _make_psnr_kernel(tr, inner, steps_per_chunk, rows_total, need_mask):
    n_iters = tr // inner

    def kernel(f_ref, t_ref, sse_ref, max_ref, min_ref):
        k = pl.program_id(1)

        @pl.when(k == 0)
        def _():
            sse_ref[...] = jnp.zeros_like(sse_ref)
            max_ref[...] = jnp.zeros_like(max_ref)   # torchmetrics max_target state = 0.0
            min_ref[...] = jnp.zeros_like(min_ref)   # torchmetrics min_target state = 0.0

        # Unclamped global row offset of this block (clamped duplicate blocks mask to zero).
        block_row0 = (pl.program_id(0) * steps_per_chunk + k) * tr

        if need_mask:
            # Loop-invariant: hoisted out of the fori_loop (JAX does not CSE broadcasts).
            row_idx = lax.broadcasted_iota(jnp.int32, (inner, _LANES), 0)

        def body(i, carry):
            sse, mx, mn = carry
            r0 = pl.multiple_of(i * inner, inner)
            f = f_ref[pl.ds(r0, inner), :].astype(jnp.float32)
            t = t_ref[pl.ds(r0, inner), :].astype(jnp.float32)
            d2 = f - t
            d2 = d2 * d2
            if need_mask:
                valid = rows_total - (block_row0 + r0)        # rows still in range (may be <= 0)
                m = row_idx < valid
                d2 = jnp.where(m, d2, 0.0)                    # masked diff adds nothing to SSE
                t = jnp.where(m, t, 0.0)                      # exact under the 0.0-init state
            d2 = d2.reshape(inner // 8, 8, _LANES)            # vreg-tile-preserving reshape
            t = t.reshape(inner // 8, 8, _LANES)
            sse = sse + jnp.sum(d2, axis=0)                   # pure VPU adds
            mx = jnp.maximum(mx, jnp.max(t, axis=0))
            mn = jnp.minimum(mn, jnp.min(t, axis=0))
            return sse, mx, mn

        zeros = jnp.zeros((8, _LANES), jnp.float32)
        sse, mx, mn = lax.fori_loop(0, n_iters, body, (zeros, zeros, zeros),
                                    unroll=2 if n_iters > 1 else 1)

        sse_ref[0] = sse_ref[0] + sse
        max_ref[0] = jnp.maximum(max_ref[0], mx)
        min_ref[0] = jnp.minimum(min_ref[0], mn)

    return kernel


def loss_psnr(im_fake, im_true):
    """Pallas implementation of Loss_PSNR.forward. Inputs: equal-shape arrays (e.g. NCHW)."""
    assert im_fake.shape == im_true.shape
    numel = int(im_fake.size)
    if numel == 0:
        return jnp.float32(jnp.nan)

    flat_f = im_fake.reshape(-1)
    flat_t = im_true.reshape(-1)

    rows = numel // _LANES
    rem = numel - rows * _LANES

    # Sub-128-element lane tail: tiny pure-JAX reduction (avoids any full-array pad copy).
    if rem:
        tail_f = flat_f[rows * _LANES:].astype(jnp.float32)
        tail_t = flat_t[rows * _LANES:].astype(jnp.float32)
        tail_sse = jnp.sum((tail_f - tail_t) ** 2)
        tail_max = jnp.max(tail_t)
        tail_min = jnp.min(tail_t)

    if rows == 0:
        sse, tmax, tmin = tail_sse, tail_max, tail_min
    else:
        if rem:
            # TODO(synk): this prefix slice may materialize one bulk copy in XLA; unavoidable
            # for lane-ragged numel without N-D-aware manual DMA. Aligned numel is copy-free.
            fake2d = flat_f[: rows * _LANES].reshape(rows, _LANES)
            true2d = flat_t[: rows * _LANES].reshape(rows, _LANES)
        else:
            fake2d = flat_f.reshape(rows, _LANES)   # pure bitcast, no HBM copy
            true2d = flat_t.reshape(rows, _LANES)

        isz_f = jnp.dtype(im_fake.dtype).itemsize
        isz_t = jnp.dtype(im_true.dtype).itemsize
        sub_mult = max(8, 32 // max(min(isz_f, isz_t), 1))      # f32->8, bf16->16, int8->32

        # Byte-budgeted streaming tile: ~4 MiB per input per pipeline buffer.
        tr_max = _TILE_BYTES // (_LANES * max(isz_f, isz_t))    # 8192 rows f32, 16384 bf16
        tr = min(tr_max, _round_up(rows, sub_mult))
        if tr > _INNER_ROWS:
            tr = _round_up(tr, _INNER_ROWS)                     # stays <= tr_max (tr_max % 128 == 0)
        inner = min(_INNER_ROWS, tr)

        steps_total = -(-rows // tr)
        num_chunks = min(_num_tensorcores_per_chip(), steps_total)
        steps_per_chunk = -(-steps_total // num_chunks)
        need_mask = (rows % tr != 0) or (num_chunks * steps_per_chunk != steps_total)
        last_block = steps_total - 1

        # Clamp block index so no DMA ever goes out of bounds; masking (from the unclamped
        # program-id-derived offset) zeroes any duplicated / padded rows.
        in_map = lambda c, k: (jnp.minimum(c * steps_per_chunk + k, last_block), 0)
        out_map = lambda c, k: (c, 0, 0)
        part_shape = jax.ShapeDtypeStruct((num_chunks, 8, _LANES), jnp.float32)

        pipelined_bytes = 2 * tr * _LANES * (isz_f + isz_t)     # 2 buffers x both inputs
        vmem_limit = min(max(pipelined_bytes + (16 << 20), 24 << 20), 48 << 20)

        kernel = _make_psnr_kernel(tr, inner, steps_per_chunk, rows, need_mask)

        def call(dims):
            return pl.pallas_call(
                kernel,
                out_shape=(part_shape, part_shape, part_shape),
                grid_spec=pltpu.PrefetchScalarGridSpec(
                    num_scalar_prefetch=0,
                    grid=(num_chunks, steps_per_chunk),
                    in_specs=[
                        pl.BlockSpec((tr, _LANES), in_map),
                        pl.BlockSpec((tr, _LANES), in_map),
                    ],
                    out_specs=[
                        pl.BlockSpec((1, 8, _LANES), out_map),
                        pl.BlockSpec((1, 8, _LANES), out_map),
                        pl.BlockSpec((1, 8, _LANES), out_map),
                    ],
                ),
                compiler_params=pltpu.CompilerParams(
                    dimension_semantics=dims,
                    vmem_limit_bytes=int(vmem_limit),
                ),
                cost_estimate=pl.CostEstimate(
                    flops=5 * numel,
                    transcendentals=0,
                    bytes_accessed=numel * (isz_f + isz_t) + 3 * num_chunks * 8 * _LANES * 4,
                ),
            )(fake2d, true2d)

        if num_chunks > 1:
            try:
                sse_p, max_p, min_p = call((pltpu.CORE_PARALLEL, pltpu.ARBITRARY))
            except Exception:
                # CORE_PARALLEL unsupported on this chip/runtime; plain grid is still correct.
                sse_p, max_p, min_p = call(("parallel", "arbitrary"))
        else:
            sse_p, max_p, min_p = call(("arbitrary", "arbitrary"))

        # Final combine (once, in XLA): cross-lane/sublane/chunk reduce.
        sse = jnp.sum(sse_p)
        tmax = jnp.max(max_p)
        tmin = jnp.min(min_p)
        if rem:
            sse = sse + tail_sse
            tmax = jnp.maximum(tmax, tail_max)
            tmin = jnp.minimum(tmin, tail_min)

    data_range = jnp.maximum(tmax, 0.0) - jnp.minimum(tmin, 0.0)
    mse = sse / jnp.float32(numel)
    # 10 * log10(data_range^2 / mse) == (2*ln(dr) - ln(mse)) * 10/ln(10)
    return (2.0 * jnp.log(data_range) - jnp.log(mse)) * (10.0 / jnp.log(jnp.float32(10.0)))


def _reference(im_fake, im_true):
    f = im_fake.astype(jnp.float32)
    t = im_true.astype(jnp.float32)
    sse = jnp.sum((f - t) ** 2)
    mse = sse / f.size
    data_range = jnp.maximum(jnp.max(t), 0.0) - jnp.minimum(jnp.min(t), 0.0)
    return 10.0 * (2.0 * jnp.log(data_range) - jnp.log(mse)) / jnp.log(10.0)


if __name__ == "__main__":
    key = jax.random.PRNGKey(0)
    k1, k2 = jax.random.split(key)

    shape = (2, 4, 16, 16)  # NCHW
    im_true = jax.random.uniform(k1, shape, dtype=jnp.float32)
    im_fake = im_true + 0.05 * jax.random.normal(k2, shape, dtype=jnp.float32)

    psnr = jax.block_until_ready(loss_psnr(im_fake, im_true))
    ref = _reference(im_fake, im_true)
    assert jnp.allclose(psnr, ref, rtol=1e-4, atol=1e-4), (psnr, ref)

    # Ragged path: numel not a multiple of 128 (lane tail in XLA, row tail masked in-kernel).
    shape2 = (3, 3, 17, 19)
    t2 = jax.random.uniform(k1, shape2, dtype=jnp.float32) * 2.0
    f2 = t2 + 0.1 * jax.random.normal(k2, shape2, dtype=jnp.float32)
    psnr2 = jax.block_until_ready(loss_psnr(f2, t2))
    ref2 = _reference(f2, t2)
    assert jnp.allclose(psnr2, ref2, rtol=1e-4, atol=1e-4), (psnr2, ref2)

    print("KERNEL_OK")
</pallas_src>

<mosaic_0001>
module attributes {stable_mosaic.version = 11 : i64} {
  func.func @kernel(%arg0: i32, %arg1: i32, %arg2: memref<16x128xf32, #tpu.memory_space<vmem>>, %arg3: memref<16x128xf32, #tpu.memory_space<vmem>>, %arg4: memref<1x8x128xf32, #tpu.memory_space<vmem>>, %arg5: memref<1x8x128xf32, #tpu.memory_space<vmem>>, %arg6: memref<1x8x128xf32, #tpu.memory_space<vmem>>) attributes {dimension_semantics = [#tpu.dimension_semantics<arbitrary>, #tpu.dimension_semantics<arbitrary>], iteration_bounds = array<i64: 1, 1>, scalar_prefetch = 0 : i64, scratch_operands = 0 : i64, tpu.core_type = #tpu.core_type<tc>, window_params = [{transform_indices = @transform_0, window_bounds = array<i64: 16, 128>}, {transform_indices = @transform_1, window_bounds = array<i64: 16, 128>}, {transform_indices = @transform_2, window_bounds = array<i64: 1, 8, 128>}, {transform_indices = @transform_3, window_bounds = array<i64: 1, 8, 128>}, {transform_indices = @transform_4, window_bounds = array<i64: 1, 8, 128>}]} {
    %c0_i32 = arith.constant 0 : i32
    %0 = arith.cmpi eq, %arg1, %c0_i32 : i32
    %1 = arith.extui %0 : i1 to i32
    %c0_i32_0 = arith.constant 0 : i32
    %2 = arith.cmpi ne, %1, %c0_i32_0 : i32
    scf.if %2 {
      %cst_24 = arith.constant 0.000000e+00 : f32
      %38 = vector.broadcast %cst_24 : f32 to vector<1x8x128xf32>
      %c0_25 = arith.constant 0 : index
      %c0_26 = arith.constant 0 : index
      %c0_27 = arith.constant 0 : index
      %39 = vector.load %arg4[%c0_25, %c0_26, %c0_27] : memref<1x8x128xf32, #tpu.memory_space<vmem>>, vector<1x8x128xf32>
      tpu.vector_store %arg4[%c0_25, %c0_26, %c0_27], %38 {strides = array<i32>} : memref<1x8x128xf32, #tpu.memory_space<vmem>>, vector<1x8x128xf32>,
      %cst_28 = arith.constant 0.000000e+00 : f32
      %40 = vector.broadcast %cst_28 : f32 to vector<1x8x128xf32>
      %c0_29 = arith.constant 0 : index
      %c0_30 = arith.constant 0 : index
      %c0_31 = arith.constant 0 : index
      %41 = vector.load %arg5[%c0_29, %c0_30, %c0_31] : memref<1x8x128xf32, #tpu.memory_space<vmem>>, vector<1x8x128xf32>
      tpu.vector_store %arg5[%c0_29, %c0_30, %c0_31], %40 {strides = array<i32>} : memref<1x8x128xf32, #tpu.memory_space<vmem>>, vector<1x8x128xf32>,
      %cst_32 = arith.constant 0.000000e+00 : f32
      %42 = vector.broadcast %cst_32 : f32 to vector<1x8x128xf32>
      %c0_33 = arith.constant 0 : index
      %c0_34 = arith.constant 0 : index
      %c0_35 = arith.constant 0 : index
      %43 = vector.load %arg6[%c0_33, %c0_34, %c0_35] : memref<1x8x128xf32, #tpu.memory_space<vmem>>, vector<1x8x128xf32>
      tpu.vector_store %arg6[%c0_33, %c0_34, %c0_35], %42 {strides = array<i32>} : memref<1x8x128xf32, #tpu.memory_space<vmem>>, vector<1x8x128xf32>,
    } else {
    }
    %cst = arith.constant 0.000000e+00 : f32
    %3 = vector.broadcast %cst : f32 to vector<8x128xf32>
    %c0_i32_1 = arith.constant 0 : i32
    %c16_i32 = arith.constant 16 : i32
    %4 = arith.muli %c0_i32_1, %c16_i32 : i32
    %5 = tpu.assume_multiple %4, 16 : i32
    %6 = arith.index_cast %5 : i32 to index
    %c0 = arith.constant 0 : index
    %7 = vector.load %arg2[%6, %c0] : memref<16x128xf32, #tpu.memory_space<vmem>>, vector<16x128xf32>
    %8 = arith.index_cast %5 : i32 to index
    %c0_2 = arith.constant 0 : index
    %9 = vector.load %arg3[%8, %c0_2] : memref<16x128xf32, #tpu.memory_space<vmem>>, vector<16x128xf32>
    %10 = arith.subf %7, %9 : vector<16x128xf32>
    %11 = arith.mulf %10, %10 : vector<16x128xf32>
    %12 = vector.shape_cast %11 : vector<16x128xf32> to vector<2x8x128xf32>
    %13 = vector.shape_cast %9 : vector<16x128xf32> to vector<2x8x128xf32>
    %cst_3 = arith.constant dense<0.000000e+00> : vector<8x128xf32>
    %14 = vector.multi_reduction <add>, %12, %cst_3 [0] : vector<2x8x128xf32> to vector<8x128xf32>
    %15 = arith.addf %3, %14 : vector<8x128xf32>
    %cst_4 = arith.constant dense<0xFF800000> : vector<8x128xf32>
    %16 = vector.multi_reduction <maximumf>, %13, %cst_4 [0] : vector<2x8x128xf32> to vector<8x128xf32>
    %17 = arith.maximumf %3, %16 : vector<8x128xf32>
    %cst_5 = arith.constant dense<0x7F800000> : vector<8x128xf32>
    %18 = vector.multi_reduction <minimumf>, %13, %cst_5 [0] : vector<2x8x128xf32> to vector<8x128xf32>
    %19 = arith.minimumf %3, %18 : vector<8x128xf32>
    %c1_i32 = arith.constant 1 : i32
    %c0_6 = arith.constant 0 : index
    %c0_7 = arith.constant 0 : index
    %c0_8 = arith.constant 0 : index
    %20 = vector.load %arg4[%c0_6, %c0_7, %c0_8] : memref<1x8x128xf32, #tpu.memory_space<vmem>>, vector<1x8x128xf32>
    %21 = vector.shape_cast %20 : vector<1x8x128xf32> to vector<8x128xf32>
    %22 = arith.addf %21, %15 : vector<8x128xf32>
    %c0_9 = arith.constant 0 : index
    %c0_10 = arith.constant 0 : index
    %c0_11 = arith.constant 0 : index
    %23 = vector.load %arg4[%c0_9, %c0_10, %c0_11] : memref<1x8x128xf32, #tpu.memory_space<vmem>>, vector<1x8x128xf32>
    %24 = vector.shape_cast %23 : vector<1x8x128xf32> to vector<8x128xf32>
    %25 = vector.shape_cast %22 : vector<8x128xf32> to vector<1x8x128xf32>
    tpu.vector_store %arg4[%c0_9, %c0_10, %c0_11], %25 {strides = array<i32>} : memref<1x8x128xf32, #tpu.memory_space<vmem>>, vector<1x8x128xf32>,
    %c0_12 = arith.constant 0 : index
    %c0_13 = arith.constant 0 : index
    %c0_14 = arith.constant 0 : index
    %26 = vector.load %arg5[%c0_12, %c0_13, %c0_14] : memref<1x8x128xf32, #tpu.memory_space<vmem>>, vector<1x8x128xf32>
    %27 = vector.shape_cast %26 : vector<1x8x128xf32> to vector<8x128xf32>
    %28 = arith.maximumf %27, %17 : vector<8x128xf32>
    %c0_15 = arith.constant 0 : index
    %c0_16 = arith.constant 0 : index
    %c0_17 = arith.constant 0 : index
    %29 = vector.load %arg5[%c0_15, %c0_16, %c0_17] : memref<1x8x128xf32, #tpu.memory_space<vmem>>, vector<1x8x128xf32>
    %30 = vector.shape_cast %29 : vector<1x8x128xf32> to vector<8x128xf32>
    %31 = vector.shape_cast %28 : vector<8x128xf32> to vector<1x8x128xf32>
    tpu.vector_store %arg5[%c0_15, %c0_16, %c0_17], %31 {strides = array<i32>} : memref<1x8x128xf32, #tpu.memory_space<vmem>>, vector<1x8x128xf32>,
    %c0_18 = arith.constant 0 : index
    %c0_19 = arith.constant 0 : index
    %c0_20 = arith.constant 0 : index
    %32 = vector.load %arg6[%c0_18, %c0_19, %c0_20] : memref<1x8x128xf32, #tpu.memory_space<vmem>>, vector<1x8x128xf32>
    %33 = vector.shape_cast %32 : vector<1x8x128xf32> to vector<8x128xf32>
    %34 = arith.minimumf %33, %19 : vector<8x128xf32>
    %c0_21 = arith.constant 0 : index
    %c0_22 = arith.constant 0 : index
    %c0_23 = arith.constant 0 : index
    %35 = vector.load %arg6[%c0_21, %c0_22, %c0_23] : memref<1x8x128xf32, #tpu.memory_space<vmem>>, vector<1x8x128xf32>
    %36 = vector.shape_cast %35 : vector<1x8x128xf32> to vector<8x128xf32>
    %37 = vector.shape_cast %34 : vector<8x128xf32> to vector<1x8x128xf32>
    tpu.vector_store %arg6[%c0_21, %c0_22, %c0_23], %37 {strides = array<i32>} : memref<1x8x128xf32, #tpu.memory_space<vmem>>, vector<1x8x128xf32>,
    return
  }
  func.func @transform_0(%arg0: i32, %arg1: i32) -> (i32, i32) {
    %c1_i32 = arith.constant 1 : i32
    %0 = arith.muli %arg0, %c1_i32 : i32
    %1 = arith.addi %0, %arg1 : i32
    %c0_i32 = arith.constant 0 : i32
    %2 = arith.minsi %1, %c0_i32 : i32
    %c0_i32_0 = arith.constant 0 : i32
    %c0_i32_1 = arith.constant 0 : i32
    return %2, %c0_i32_0 : i32, i32
  }
  func.func @transform_1(%arg0: i32, %arg1: i32) -> (i32, i32) {
    %c1_i32 = arith.constant 1 : i32
    %0 = arith.muli %arg0, %c1_i32 : i32
    %1 = arith.addi %0, %arg1 : i32
    %c0_i32 = arith.constant 0 : i32
    %2 = arith.minsi %1, %c0_i32 : i32
    %c0_i32_0 = arith.constant 0 : i32
    %c0_i32_1 = arith.constant 0 : i32
    return %2, %c0_i32_0 : i32, i32
  }
  func.func @transform_2(%arg0: i32, %arg1: i32) -> (i32, i32, i32) {
    %c0_i32 = arith.constant 0 : i32
    %c0_i32_0 = arith.constant 0 : i32
    %c0_i32_1 = arith.constant 0 : i32
    return %arg0, %c0_i32, %c0_i32_0 : i32, i32, i32
  }
  func.func @transform_3(%arg0: i32, %arg1: i32) -> (i32, i32, i32) {
    %c0_i32 = arith.constant 0 : i32
    %c0_i32_0 = arith.constant 0 : i32
    %c0_i32_1 = arith.constant 0 : i32
    return %arg0, %c0_i32, %c0_i32_0 : i32, i32, i32
  }
  func.func @transform_4(%arg0: i32, %arg1: i32) -> (i32, i32, i32) {
    %c0_i32 = arith.constant 0 : i32
    %c0_i32_0 = arith.constant 0 : i32
    %c0_i32_1 = arith.constant 0 : i32
    return %arg0, %c0_i32, %c0_i32_0 : i32, i32, i32
  }
}

</mosaic_0001>

<llo_original>
// kernel: tpu_custom_call.1
$region0: #{tpu_custom_call.1}
  #allocation0 [shape = 'u32[]', space=smem, size = 0x4, offset = 0x4, fixed_abs, tag = 'smem constant byte address 0x4 - core index']
  #allocation1 [shape = 'u32[144,128]{1,0:T(1,128)}', space=vmem, size = 0x12000, scoped, tag = 'internal scratch']
  %s0 = inlined_call_operand.hbm [shape: f32[16,128], index: 0, kind: input, shape index: {}]
  %s1 = inlined_call_operand.hbm [shape: f32[16,128], index: 1, kind: input, shape index: {}]
  %s2 = inlined_call_operand.hbm [shape: f32[1,8,128], index: 2, kind: output, shape index: {0}]
  %s3 = inlined_call_operand.hbm [shape: f32[1,8,128], index: 3, kind: output, shape index: {1}]
  %s4 = inlined_call_operand.hbm [shape: f32[1,8,128], index: 4, kind: output, shape index: {2}]
  %5 = xla_tuple %s2, %s3, %s4
  %s6 = sld [smem:[#allocation0]]
  $region46: #{tpu_custom_call.1} parent=0
    _
  %s8 = ssub.s32 1, %s6
  %s9 = scalar_select 0, %s8, %s6
  $region1: #{tpu_custom_call.1} parent=0
    #allocation2 [shape = 'u8[8192]{0}', space=vmem, size = 0x2000, scoped, tag = 'input window, operand 0, single buffered']
    #allocation3 [shape = 's32[1]{0}', space=sflag, size = 0x4, scoped, tag = 'scoped memory for tpu_custom_call.1']
    #allocation4 [shape = 's32[1]{0}', space=sflag, size = 0x4, scoped, tag = 'scoped memory for tpu_custom_call.1']
    #allocation5 [shape = 'u8[8192]{0}', space=vmem, size = 0x2000, scoped, tag = 'input window, operand 1, single buffered']
    #allocation6 [shape = 's32[1]{0}', space=sflag, size = 0x4, scoped, tag = 'scoped memory for tpu_custom_call.1']
    #allocation7 [shape = 'u8[4096]{0}', space=vmem, size = 0x1000, scoped, tag = 'output window, operand 0, single buffered']
    #allocation8 [shape = 'u8[4096]{0}', space=vmem, size = 0x1000, scoped, tag = 'output window, operand 1, single buffered']
    #allocation9 [shape = 's32[1]{0}', space=sflag, size = 0x4, scoped, tag = 'scoped memory for tpu_custom_call.1']
    #allocation10 [shape = 'u8[4096]{0}', space=vmem, size = 0x1000, scoped, tag = 'output window, operand 2, single buffered']
    %10 = vsyncpa [#allocation3], 0
    %11 = vsyncpa [#allocation6], 0
    %12 = vsyncpa [#allocation4], 0
    %13 = vsyncpa [#allocation9], 0
    // Predicated region
    $region2: #{tpu_custom_call.1} parent=1 // pred_check
      _
    $region3: #{tpu_custom_call.1} parent=1 // pred_check_branch
      %15 = sbr.rel (0) target = $region5
    $region4: #{tpu_custom_call.1} parent=1 // pred_region
      %s16 = sadd.s32 0, 0
      %p17 = scmp.lt.s32.totalorder %s16, 0
      %s18 = scalar_select %p17, %s16, 0
      %s19 = smul.u32 2, %s18
      %s21 = ssub.s32 256, 256
      %22 = vsyncadd [#allocation3], %s21
      %s23 = smul.addr %s19, 128
      %s24 = scalar_lea.hbm %s0, %s23
      %s25 = sshll.u32 [#allocation2], 4
      %s26 = int_to_ptr.vmem [resolvable:$true] %s25
      %31 = dma.hbm_to_vmem [thread:$0]  %s24, 256, %s26, [#allocation3], 128, 128, 8
    $region5: #{tpu_custom_call.1} parent=1 // pred_fallthru
      _
    // Predicated region
    $region6: #{tpu_custom_call.1} parent=1 // pred_check
      _
    $region7: #{tpu_custom_call.1} parent=1 // pred_check_branch
      %33 = sbr.rel (0) target = $region9
    $region8: #{tpu_custom_call.1} parent=1 // pred_region
      %s34 = sadd.s32 0, 0
      %p35 = scmp.lt.s32.totalorder %s34, 0
      %s36 = scalar_select %p35, %s34, 0
      %s37 = smul.u32 2, %s36
      %s39 = ssub.s32 256, 256
      %40 = vsyncadd [#allocation6], %s39
      %s41 = smul.addr %s37, 128
      %s42 = scalar_lea.hbm %s1, %s41
      %s43 = sshll.u32 [#allocation5], 4
      %s44 = int_to_ptr.vmem [resolvable:$true] %s43
      %49 = dma.hbm_to_vmem [thread:$0]  %s42, 256, %s44, [#allocation6], 128, 128, 8
    $region9: #{tpu_custom_call.1} parent=1 // pred_fallthru
      _
    // Predicated region
    $region10: #{tpu_custom_call.1} parent=1 // pred_check
      _
    $region11: #{tpu_custom_call.1} parent=1 // pred_check_branch
      %51 = sbr.rel (0) target = $region13
    $region12: #{tpu_custom_call.1} parent=1 // pred_region
      %52 = dma.done [#allocation3], 256
    $region13: #{tpu_custom_call.1} parent=1 // pred_fallthru
      _
    // Predicated region
    $region14: #{tpu_custom_call.1} parent=1 // pred_check
      _
    $region15: #{tpu_custom_call.1} parent=1 // pred_check_branch
      %54 = sbr.rel (0) target = $region17
    $region16: #{tpu_custom_call.1} parent=1 // pred_region
      %55 = dma.done [#allocation6], 256
    $region17: #{tpu_custom_call.1} parent=1 // pred_fallthru
      _
    %s56 = sadd.s32 0, 0
    %p57 = scmp.lt.s32.totalorder %s56, 0
    %s58 = scalar_select %p57, %s56, 0
    %s59 = smul.u32 2, %s58
    %s60 = sadd.s32 0, 0
    %p61 = scmp.lt.s32.totalorder %s60, 0
    %s62 = scalar_select %p61, %s60, 0
    %s63 = smul.u32 2, %s62
    %p64 = scmp.eq.s32.totalorder 0, 0
    // Predicated region
    $region18: #{tpu_custom_call.1} parent=1 // pred_check
      %p65 = pneg %p64
    $region19: #{tpu_custom_call.1} parent=1 // pred_check_branch
      %67 = sbr.rel (%p65) target = $region21
    $region20: #{tpu_custom_call.1} parent=1 // pred_region
      %68 = vst [vmem:[#allocation7] sm:$0xff] 0.0
      %69 = vst [vmem:[#allocation8] sm:$0xff] 0.0
      %70 = vst [vmem:[#allocation10] sm:$0xff] 0.0
    $region21: #{tpu_custom_call.1} parent=1 // pred_fallthru
      _
    %v71 = vld [vmem:[#allocation2] sm:$0xff]
    %v72 = vld [vmem:[#allocation2 + $0x8] sm:$0xff]
    %v73 = vld [vmem:[#allocation5] sm:$0xff]
    %v74 = vld [vmem:[#allocation5 + $0x8] sm:$0xff]
    %v75 = vsub.f32 %v71, %v73
    %v76 = vsub.f32 %v72, %v74
    %v77 = vmul.f32 %v75, %v75
    %v78 = vmul.f32 %v76, %v76
    %v79 = vadd.f32 %v77, %v78
    %v80 = vadd.f32 %v79, 0.0
    %v81 = vmax.f32 %v73, %v74
    %v82 = vmax.f32 %v81, 0.0
    %v83 = vmin.f32 %v73, %v74
    %v84 = vmin.f32 %v83, 0.0
    %v85 = vld [vmem:[#allocation7] sm:$0xff]
    %v86 = vadd.f32 %v85, %v80
    %87 = vst [vmem:[#allocation7] sm:$0xff] %v86
    %v88 = vld [vmem:[#allocation8] sm:$0xff]
    %v89 = vmax.f32 %v88, %v82
    %90 = vst [vmem:[#allocation8] sm:$0xff] %v89
    %v91 = vld [vmem:[#allocation10] sm:$0xff]
    %v92 = vmin.f32 %v91, %v84
    %93 = vst [vmem:[#allocation10] sm:$0xff] %v92
    // Predicated region
    $region22: #{tpu_custom_call.1} parent=1 // pred_check
      _
    $region23: #{tpu_custom_call.1} parent=1 // pred_check_branch
      %95 = sbr.rel (0) target = $region25
    $region24: #{tpu_custom_call.1} parent=1 // pred_region
      %s97 = ssub.s32 128, 128
      %98 = vsyncadd [#allocation4], %s97
      %s100 = sshll.u32 [#allocation7], 4
      %s101 = int_to_ptr.vmem [resolvable:$true] %s100
      %103 = dma.vmem_to_hbm [thread:$0]  %s101, 128, %s2, [#allocation4]
    $region25: #{tpu_custom_call.1} parent=1 // pred_fallthru
      _
    // Predicated region
    $region26: #{tpu_custom_call.1} parent=1 // pred_check
      _
    $region27: #{tpu_custom_call.1} parent=1 // pred_check_branch
      %105 = sbr.rel (0) target = $region29
    $region28: #{tpu_custom_call.1} parent=1 // pred_region
      %s107 = ssub.s32 128, 128
      %108 = vsyncadd [#allocation9], %s107
      %s110 = sshll.u32 [#allocation8], 4
      %s111 = int_to_ptr.vmem [resolvable:$true] %s110
      %113 = dma.vmem_to_hbm [thread:$0]  %s111, 128, %s3, [#allocation9]
    $region29: #{tpu_custom_call.1} parent=1 // pred_fallthru
      _
    // Predicated region
    $region30: #{tpu_custom_call.1} parent=1 // pred_check
      _
    $region31: #{tpu_custom_call.1} parent=1 // pred_check_branch
      %115 = sbr.rel (0) target = $region33
    $region32: #{tpu_custom_call.1} parent=1 // pred_region
      %s117 = ssub.s32 128, 128
      %118 = vsyncadd [#allocation9], %s117
      %s120 = sshll.u32 [#allocation10], 4
      %s121 = int_to_ptr.vmem [resolvable:$true] %s120
      %123 = dma.vmem_to_hbm [thread:$0]  %s121, 128, %s4, [#allocation9]
    $region33: #{tpu_custom_call.1} parent=1 // pred_fallthru
      _
    // Predicated region
    $region34: #{tpu_custom_call.1} parent=1 // pred_check
      _
    $region35: #{tpu_custom_call.1} parent=1 // pred_check_branch
      %125 = sbr.rel (0) target = $region37
    $region36: #{tpu_custom_call.1} parent=1 // pred_region
      %126 = dma.done [#allocation4], 128
    $region37: #{tpu_custom_call.1} parent=1 // pred_fallthru
      _
    // Predicated region
    $region38: #{tpu_custom_call.1} parent=1 // pred_check
      _
    $region39: #{tpu_custom_call.1} parent=1 // pred_check_branch
      %128 = sbr.rel (0) target = $region41
    $region40: #{tpu_custom_call.1} parent=1 // pred_region
      %129 = dma.done [#allocation9], 128
    $region41: #{tpu_custom_call.1} parent=1 // pred_fallthru
      _
    // Predicated region
    $region42: #{tpu_custom_call.1} parent=1 // pred_check
      _
    $region43: #{tpu_custom_call.1} parent=1 // pred_check_branch
      %131 = sbr.rel (0) target = $region45
    $region44: #{tpu_custom_call.1} parent=1 // pred_region
      %132 = dma.done [#allocation9], 128
    $region45: #{tpu_custom_call.1} parent=1 // pred_fallthru
      _
    %133 = vsyncpa [#allocation3], 1
    %134 = vsyncpa [#allocation6], 1
    %135 = vsyncpa [#allocation4], 1
    %136 = vsyncpa [#allocation9], 1

</llo_original>
